<compile_context>
chip_gen: v7x
topology: tpu7x:2x2x1
jax: 0.10.0
libtpu: 0.0.40
codegen_flags: <defaults>
</compile_context>

<pallas_src>
import functools

import jax
import jax.numpy as jnp
from jax import lax
from jax.experimental import pallas as pl
from jax.experimental.pallas import tpu as pltpu


def _cdiv(a, b):
    return -(-a // b)


def _se_kernel(x_ref, w1_ref, b1_ref, w2_ref, b2_ref, o_ref, *,
               inv_hw, hw_chunk, n_full, rem):
    bt, C, HW = x_ref.shape

    # ---- Squeeze: chunked spatial sum, f32 accumulation.  Only a (bt, C) f32
    # accumulator (plus one small chunk cast) stays live -> no full-tile f32 temp.
    if n_full == 1 and rem == 0:
        pooled = jnp.sum(x_ref[...].astype(jnp.float32), axis=-1)
    else:
        def body(c, acc):
            start = pl.multiple_of(c * hw_chunk, hw_chunk)
            chunk = x_ref[:, :, pl.ds(start, hw_chunk)]
            return acc + jnp.sum(chunk.astype(jnp.float32), axis=-1)

        pooled = lax.fori_loop(0, n_full, body,
                               jnp.zeros((bt, C), jnp.float32),
                               unroll=(n_full <= 8))
        if rem:
            tail = x_ref[:, :, n_full * hw_chunk:]
            pooled = pooled + jnp.sum(tail.astype(jnp.float32), axis=-1)
    pooled = pooled * inv_hw                                             # (bt, C)

    # ---- Excitation: tiny MLP in f32 (irrelevant to the HBM roofline).
    h = jnp.dot(pooled, w1_ref[...],
                preferred_element_type=jnp.float32) + b1_ref[...]        # (bt, mid)
    h = jnp.maximum(h, 0.0)
    logits = jnp.dot(h, w2_ref[...],
                     preferred_element_type=jnp.float32) + b2_ref[...]   # (bt, C)
    gates = jax.nn.sigmoid(logits)                                       # (bt, C)

    # ---- Scale: re-read x_ref (VMEM-resident pipeline buffer, so this is free
    # and keeps the big tile's live range short) and fuse the single multiply
    # directly into the output store.
    o_ref[...] = (x_ref[...] * gates[:, :, None].astype(x_ref.dtype)).astype(o_ref.dtype)


def _vmem_budget():
    """Generation-aware (tile_budget, vmem_cap). v7x has 64 MiB VMEM per TC,
    v5e/v6e have 128 MiB."""
    try:
        cap = int(getattr(pltpu.get_tpu_info(), "vmem_capacity_bytes", 0)) or (64 << 20)
    except Exception:
        cap = 64 << 20  # be conservative (v7x sizing) if the query is unavailable
    if cap <= (64 << 20):          # v7x-class: keep >= ~24 MiB headroom
        return 14 << 20, 36 << 20
    return 24 << 20, 56 << 20      # v5e / v6e


def _pick_hw_chunk(hw, max_chunk=512):
    """Chunk size for the pooled reduction. Prefer lane-aligned divisors so every
    dynamic-slice start is a multiple of 128; fall back to 512 with a static
    remainder chunk handled in-kernel."""
    if hw <= max_chunk:
        return hw
    for c in range(max_chunk, 127, -128):
        if hw % c == 0:
            return c
    return max_chunk


def _pick_batch_tile(B, per_batch_stream_bytes, per_batch_step_bytes, budget_bytes,
                     min_stream_tile=1 << 20, target_steps=8):
    """Pick the batch tile bt.  Returns None if even bt=1 does not fit (caller
    must fail loudly)."""
    if budget_bytes <= 0 or per_batch_step_bytes > budget_bytes:
        return None
    bt = max(1, min(B, budget_bytes // per_batch_step_bytes))

    # Smallest bt that still keeps a >= ~1 MiB streaming tile (measured knee of
    # the HBM roofline), or the whole tensor if it is smaller than that.
    floor_bytes = min(min_stream_tile, B * per_batch_stream_bytes)
    bt_floor = min(bt, max(1, _cdiv(floor_bytes, per_batch_stream_bytes)))

    # Lengthen the grid for pipeline depth (and megacore balance) when possible.
    while bt > bt_floor and _cdiv(B, bt) < target_steps:
        bt -= 1

    # Prefer an even grid: the "parallel" batch axis is sharded across v7x's 2 TCs.
    if _cdiv(B, bt) > 1 and _cdiv(B, bt) % 2 == 1:
        for cand in range(bt - 1, bt_floor - 1, -1):
            if _cdiv(B, cand) % 2 == 0:
                bt = cand
                break
    return bt


def se_block(x_nchw, w1, b1, w2, b2):
    """x_nchw: (B, C, H, W). w1: (C, mid), b1: (1, mid), w2: (mid, C), b2: (1, C)
    (weights already transposed to x @ W form)."""
    B, C, H, W = x_nchw.shape
    HW = H * W
    mid = w1.shape[1]
    dsize = jnp.dtype(x_nchw.dtype).itemsize

    x_flat = x_nchw.reshape(B, C, HW)
    # TODO(synk): when HW % 128 != 0 but C % 128 == 0 (late CNN layers), a
    # channels-last (B, HW, C) kernel variant would keep the lane axis dense and
    # avoid masked stores; not done here since it needs an extra HBM transpose.

    hw_chunk = _pick_hw_chunk(HW)
    n_full, rem = HW // hw_chunk, HW % hw_chunk

    tile_budget, vmem_cap = _vmem_budget()
    headroom = 2 << 20  # Mosaic internal scratch, small temps
    weight_bytes = sum(int(a.size) * jnp.dtype(a.dtype).itemsize
                       for a in (w1, b1, w2, b2))
    weight_vmem = 2 * weight_bytes  # BlockSpec buffers even resident inputs twice

    # Per-batch VMEM in one grid step: double-buffered in + out tiles, plus the
    # f32 chunk temp of the chunked pool and the small (C,) f32 accumulators.
    per_batch_stream_bytes = C * HW * dsize
    per_batch_step_bytes = (4 * per_batch_stream_bytes
                            + C * hw_chunk * 4
                            + 4 * C * 4)

    budget_for_tiles = min(tile_budget, vmem_cap - weight_vmem - headroom)
    bt = _pick_batch_tile(B, per_batch_stream_bytes, per_batch_step_bytes,
                          budget_for_tiles)
    if bt is None:
        # TODO(synk): add a second grid axis over HW with a pl.when-initialized
        # pooled-sum scratch accumulator for single images too large for VMEM.
        raise ValueError(
            "SEBlock kernel: a single batch element needs "
            f"{per_batch_step_bytes / 2**20:.1f} MiB of VMEM per grid step, which "
            f"exceeds the {budget_for_tiles / 2**20:.1f} MiB tile budget on this TPU "
            "generation; tile the spatial axis instead of raising the VMEM limit.")

    vmem_needed = bt * per_batch_step_bytes + weight_vmem + headroom
    if vmem_needed > vmem_cap:  # fail loudly rather than silently clamping
        raise ValueError(
            f"SEBlock kernel: computed VMEM need {vmem_needed / 2**20:.1f} MiB "
            f"exceeds the {vmem_cap / 2**20:.1f} MiB cap for this TPU generation.")
    vmem_limit = int(min(max(vmem_needed, 8 << 20), vmem_cap))

    kernel = functools.partial(_se_kernel, inv_hw=float(1.0 / HW),
                               hw_chunk=hw_chunk, n_full=n_full, rem=rem)

    cost = pl.CostEstimate(
        flops=2 * B * C * HW + 2 * B * C * mid + 2 * B * mid * C,
        transcendentals=B * C,
        bytes_accessed=2 * B * C * HW * dsize + weight_bytes,
    )

    num_steps = _cdiv(B, bt)  # partial last block is masked by Pallas

    out_flat = pl.pallas_call(
        kernel,
        out_shape=jax.ShapeDtypeStruct((B, C, HW), x_nchw.dtype),
        grid=(num_steps,),
        in_specs=[
            pl.BlockSpec((bt, C, HW), lambda b: (b, 0, 0)),   # x: tiled over batch
            pl.BlockSpec((C, mid), lambda b: (0, 0)),         # w1: resident
            pl.BlockSpec((1, mid), lambda b: (0, 0)),         # b1: resident
            pl.BlockSpec((mid, C), lambda b: (0, 0)),         # w2: resident
            pl.BlockSpec((1, C), lambda b: (0, 0)),           # b2: resident
        ],
        out_specs=pl.BlockSpec((bt, C, HW), lambda b: (b, 0, 0)),
        compiler_params=pltpu.CompilerParams(
            dimension_semantics=("parallel",),
            vmem_limit_bytes=vmem_limit,
        ),
        cost_estimate=cost,
    )(x_flat, w1, b1, w2, b2)

    return out_flat.reshape(B, C, H, W)


if __name__ == "__main__":
    # Small shapes consistent with the module: input_dim (= channels) divisible by 4.
    B, C, Hs, Ws = 2, 8, 16, 16
    mid = C // 4

    key = jax.random.PRNGKey(0)
    kx, k1, kb1, k2, kb2 = jax.random.split(key, 5)

    x = jax.random.normal(kx, (B, C, Hs, Ws), dtype=jnp.float32)

    # Deterministic params (nn.Linear(C, mid) / nn.Linear(mid, C)), stored
    # pre-transposed so the kernel computes x @ W (+ b).
    w1 = jax.random.normal(k1, (C, mid), dtype=jnp.float32) * 0.1
    b1 = jax.random.normal(kb1, (1, mid), dtype=jnp.float32) * 0.1
    w2 = jax.random.normal(k2, (mid, C), dtype=jnp.float32) * 0.1
    b2 = jax.random.normal(kb2, (1, C), dtype=jnp.float32) * 0.1

    out = se_block(x, w1, b1, w2, b2)
    jax.block_until_ready(out)

    # Reference check (plain JAX) to ensure semantics match the PyTorch module.
    pooled = jnp.mean(x, axis=(2, 3))                                   # (B, C)
    h = jnp.maximum(pooled @ w1 + b1, 0.0)
    gates = jax.nn.sigmoid(h @ w2 + b2)
    ref = x * gates[:, :, None, None]
    assert jnp.allclose(out, ref, atol=1e-5, rtol=1e-5)

    print("KERNEL_OK")
</pallas_src>

<mosaic_0001>
module attributes {stable_mosaic.version = 11 : i64} {
  func.func @_se_kernel(%arg0: i32, %arg1: memref<2x8x256xf32, #tpu.memory_space<vmem>>, %arg2: memref<8x2xf32, #tpu.memory_space<vmem>>, %arg3: memref<1x2xf32, #tpu.memory_space<vmem>>, %arg4: memref<2x8xf32, #tpu.memory_space<vmem>>, %arg5: memref<1x8xf32, #tpu.memory_space<vmem>>, %arg6: memref<2x8x256xf32, #tpu.memory_space<vmem>>) attributes {dimension_semantics = [#tpu.dimension_semantics<parallel>], iteration_bounds = array<i64: 1>, scalar_prefetch = 0 : i64, scratch_operands = 0 : i64, tpu.core_type = #tpu.core_type<tc>, window_params = [{transform_indices = @transform_0, window_bounds = array<i64: 2, 8, 256>}, {pipeline_mode = #tpu.pipeline_mode<synchronous>, transform_indices = @transform_1, window_bounds = array<i64: 8, 2>}, {pipeline_mode = #tpu.pipeline_mode<synchronous>, transform_indices = @transform_2, window_bounds = array<i64: 1, 2>}, {pipeline_mode = #tpu.pipeline_mode<synchronous>, transform_indices = @transform_3, window_bounds = array<i64: 2, 8>}, {pipeline_mode = #tpu.pipeline_mode<synchronous>, transform_indices = @transform_4, window_bounds = array<i64: 1, 8>}, {transform_indices = @transform_5, window_bounds = array<i64: 2, 8, 256>}]} {
    %c0 = arith.constant 0 : index
    %c0_0 = arith.constant 0 : index
    %c0_1 = arith.constant 0 : index
    %0 = vector.load %arg1[%c0, %c0_0, %c0_1] : memref<2x8x256xf32, #tpu.memory_space<vmem>>, vector<2x8x256xf32>
    %cst = arith.constant dense<0.000000e+00> : vector<2x8xf32>
    %1 = vector.multi_reduction <add>, %0, %cst [2] : vector<2x8x256xf32> to vector<2x8xf32>
    %cst_2 = arith.constant 3.906250e-03 : f32
    %2 = vector.broadcast %cst_2 : f32 to vector<2x8xf32>
    %3 = arith.mulf %1, %2 : vector<2x8xf32>
    %c0_3 = arith.constant 0 : index
    %c0_4 = arith.constant 0 : index
    %4 = vector.load %arg2[%c0_3, %c0_4] : memref<8x2xf32, #tpu.memory_space<vmem>>, vector<8x2xf32>
    %cst_5 = arith.constant dense<0.000000e+00> : vector<2x2xf32>
    %5 = tpu.matmul %3, %4, %cst_5 {dimension_numbers = #tpu.dot_dimension_numbers<[1], [0], [0], [1], [0, 0, 1, 1], [], []>} : vector<2x8xf32>, vector<8x2xf32>, vector<2x2xf32> -> vector<2x2xf32>
    %c0_6 = arith.constant 0 : index
    %c0_7 = arith.constant 0 : index
    %6 = vector.load %arg3[%c0_6, %c0_7] : memref<1x2xf32, #tpu.memory_space<vmem>>, vector<1x2xf32>
    %7 = vector.broadcast %6 : vector<1x2xf32> to vector<2x2xf32>
    %8 = arith.addf %5, %7 : vector<2x2xf32>
    %cst_8 = arith.constant 0.000000e+00 : f32
    %9 = vector.broadcast %cst_8 : f32 to vector<2x2xf32>
    %10 = arith.maximumf %8, %9 : vector<2x2xf32>
    %c0_9 = arith.constant 0 : index
    %c0_10 = arith.constant 0 : index
    %11 = vector.load %arg4[%c0_9, %c0_10] : memref<2x8xf32, #tpu.memory_space<vmem>>, vector<2x8xf32>
    %cst_11 = arith.constant dense<0.000000e+00> : vector<2x8xf32>
    %12 = tpu.matmul %10, %11, %cst_11 {dimension_numbers = #tpu.dot_dimension_numbers<[1], [0], [0], [1], [0, 0, 1, 1], [], []>} : vector<2x2xf32>, vector<2x8xf32>, vector<2x8xf32> -> vector<2x8xf32>
    %c0_12 = arith.constant 0 : index
    %c0_13 = arith.constant 0 : index
    %13 = vector.load %arg5[%c0_12, %c0_13] : memref<1x8xf32, #tpu.memory_space<vmem>>, vector<1x8xf32>
    %14 = vector.broadcast %13 : vector<1x8xf32> to vector<2x8xf32>
    %15 = arith.addf %12, %14 : vector<2x8xf32>
    %16 = arith.negf %15 : vector<2x8xf32>
    %17 = math.exp %16 : vector<2x8xf32>
    %cst_14 = arith.constant 1.000000e+00 : f32
    %18 = vector.broadcast %cst_14 : f32 to vector<2x8xf32>
    %19 = arith.addf %18, %17 : vector<2x8xf32>
    %20 = arith.divf %18, %19 : vector<2x8xf32>
    %c0_15 = arith.constant 0 : index
    %c0_16 = arith.constant 0 : index
    %c0_17 = arith.constant 0 : index
    %21 = vector.load %arg1[%c0_15, %c0_16, %c0_17] : memref<2x8x256xf32, #tpu.memory_space<vmem>>, vector<2x8x256xf32>
    %22 = vector.shape_cast %20 : vector<2x8xf32> to vector<2x8x1xf32>
    %23 = vector.broadcast %22 : vector<2x8x1xf32> to vector<2x8x256xf32>
    %24 = arith.mulf %21, %23 : vector<2x8x256xf32>
    %c0_18 = arith.constant 0 : index
    %c0_19 = arith.constant 0 : index
    %c0_20 = arith.constant 0 : index
    %25 = vector.load %arg6[%c0_18, %c0_19, %c0_20] : memref<2x8x256xf32, #tpu.memory_space<vmem>>, vector<2x8x256xf32>
    tpu.vector_store %arg6[%c0_18, %c0_19, %c0_20], %24 {strides = array<i32>} : memref<2x8x256xf32, #tpu.memory_space<vmem>>, vector<2x8x256xf32>,
    return
  }
  func.func @transform_0(%arg0: i32) -> (i32, i32, i32) {
    %c0_i32 = arith.constant 0 : i32
    %c0_i32_0 = arith.constant 0 : i32
    %c0_i32_1 = arith.constant 0 : i32
    return %arg0, %c0_i32, %c0_i32_0 : i32, i32, i32
  }
  func.func @transform_1(%arg0: i32) -> (i32, i32) {
    %c0_i32 = arith.constant 0 : i32
    %c0_i32_0 = arith.constant 0 : i32
    %c0_i32_1 = arith.constant 0 : i32
    return %c0_i32, %c0_i32_0 : i32, i32
  }
  func.func @transform_2(%arg0: i32) -> (i32, i32) {
    %c0_i32 = arith.constant 0 : i32
    %c0_i32_0 = arith.constant 0 : i32
    %c0_i32_1 = arith.constant 0 : i32
    return %c0_i32, %c0_i32_0 : i32, i32
  }
  func.func @transform_3(%arg0: i32) -> (i32, i32) {
    %c0_i32 = arith.constant 0 : i32
    %c0_i32_0 = arith.constant 0 : i32
    %c0_i32_1 = arith.constant 0 : i32
    return %c0_i32, %c0_i32_0 : i32, i32
  }
  func.func @transform_4(%arg0: i32) -> (i32, i32) {
    %c0_i32 = arith.constant 0 : i32
    %c0_i32_0 = arith.constant 0 : i32
    %c0_i32_1 = arith.constant 0 : i32
    return %c0_i32, %c0_i32_0 : i32, i32
  }
  func.func @transform_5(%arg0: i32) -> (i32, i32, i32) {
    %c0_i32 = arith.constant 0 : i32
    %c0_i32_0 = arith.constant 0 : i32
    %c0_i32_1 = arith.constant 0 : i32
    return %arg0, %c0_i32, %c0_i32_0 : i32, i32, i32
  }
}

</mosaic_0001>

<llo_original>
// kernel: tpu_custom_call.1
$region0: #{tpu_custom_call.1}
  #allocation0 [shape = 'u32[]', space=smem, size = 0x4, offset = 0x4, fixed_abs, tag = 'smem constant byte address 0x4 - core index']
  #allocation1 [shape = 'u32[144,128]{1,0:T(1,128)}', space=vmem, size = 0x12000, scoped, tag = 'internal scratch']
  %s0 = inlined_call_operand.hbm [shape: f32[2,8,256], index: 0, kind: input, shape index: {}]
  %s1 = inlined_call_operand.vmem [shape: f32[8,2], index: 1, kind: input, shape index: {}]
  %s2 = inlined_call_operand.vmem [shape: f32[1,2], index: 2, kind: input, shape index: {}]
  %s3 = inlined_call_operand.vmem [shape: f32[2,8], index: 3, kind: input, shape index: {}]
  %s4 = inlined_call_operand.vmem [shape: f32[1,8], index: 4, kind: input, shape index: {}]
  %s5 = inlined_call_operand.hbm [shape: f32[2,8,256], index: 5, kind: output, shape index: {}]
  %s6 = sld [smem:[#allocation0]]
  $region34: #{tpu_custom_call.1} parent=0
    _
  %s8 = ssub.s32 1, %s6
  %s9 = scalar_select 0, %s8, %s6
  $region1: #{tpu_custom_call.1} parent=0
    #allocation2 [shape = 'u8[16384]{0}', space=vmem, size = 0x4000, scoped, tag = 'input window, operand 0, single buffered']
    #allocation3 [shape = 's32[1]{0}', space=sflag, size = 0x4, scoped, tag = 'scoped memory for tpu_custom_call.1']
    #allocation4 [shape = 's32[1]{0}', space=sflag, size = 0x4, scoped, tag = 'scoped memory for tpu_custom_call.1']
    #allocation5 [shape = 'u8[16384]{0}', space=vmem, size = 0x4000, scoped, tag = 'output window, operand 0, single buffered']
    %10 = vsyncpa [#allocation3], 0
    %11 = vsyncpa [#allocation4], 0
    // Predicated region
    $region2: #{tpu_custom_call.1} parent=1 // pred_check
      _
    $region3: #{tpu_custom_call.1} parent=1 // pred_check_branch
      %13 = sbr.rel (0) target = $region5
    $region4: #{tpu_custom_call.1} parent=1 // pred_region
      %s15 = ssub.s32 512, 512
      %16 = vsyncadd [#allocation3], %s15
      %s17 = sshll.u32 [#allocation2], 4
      %s18 = int_to_ptr.vmem [resolvable:$true] %s17
      %23 = dma.hbm_to_vmem [thread:$0]  %s0, 512, %s18, [#allocation3], 256, 256, 16
    $region5: #{tpu_custom_call.1} parent=1 // pred_fallthru
      _
    // Predicated region
    $region6: #{tpu_custom_call.1} parent=1 // pred_check
      _
    $region7: #{tpu_custom_call.1} parent=1 // pred_check_branch
      %25 = sbr.rel (0) target = $region9
    $region8: #{tpu_custom_call.1} parent=1 // pred_region
      _
    $region9: #{tpu_custom_call.1} parent=1 // pred_fallthru
      _
    // Predicated region
    $region10: #{tpu_custom_call.1} parent=1 // pred_check
      _
    $region11: #{tpu_custom_call.1} parent=1 // pred_check_branch
      %27 = sbr.rel (0) target = $region13
    $region12: #{tpu_custom_call.1} parent=1 // pred_region
      _
    $region13: #{tpu_custom_call.1} parent=1 // pred_fallthru
      _
    // Predicated region
    $region14: #{tpu_custom_call.1} parent=1 // pred_check
      _
    $region15: #{tpu_custom_call.1} parent=1 // pred_check_branch
      %29 = sbr.rel (0) target = $region17
    $region16: #{tpu_custom_call.1} parent=1 // pred_region
      _
    $region17: #{tpu_custom_call.1} parent=1 // pred_fallthru
      _
    // Predicated region
    $region18: #{tpu_custom_call.1} parent=1 // pred_check
      _
    $region19: #{tpu_custom_call.1} parent=1 // pred_check_branch
      %31 = sbr.rel (0) target = $region21
    $region20: #{tpu_custom_call.1} parent=1 // pred_region
      _
    $region21: #{tpu_custom_call.1} parent=1 // pred_fallthru
      _
    // Predicated region
    $region22: #{tpu_custom_call.1} parent=1 // pred_check
      _
    $region23: #{tpu_custom_call.1} parent=1 // pred_check_branch
      %33 = sbr.rel (0) target = $region25
    $region24: #{tpu_custom_call.1} parent=1 // pred_region
      %34 = dma.done [#allocation3], 512
    $region25: #{tpu_custom_call.1} parent=1 // pred_fallthru
      _
    %v35 = vld [vmem:[#allocation2] sm:$0xff]
    %v36 = vld [vmem:[#allocation2 + $0x8] sm:$0xff]
    %v37 = vld [vmem:[#allocation2 + $0x10] sm:$0xff]
    %v38 = vld [vmem:[#allocation2 + $0x18] sm:$0xff]
    %v39 = vadd.f32 %v35, %v36
    %40 = vadd.xlane.f32.xlu0 %v39
    %v41 = vpop.xlane.xlu0 %40
    %v42 = vadd.f32 %v37, %v38
    %43 = vadd.xlane.f32.xlu0 %v42
    %v44 = vpop.xlane.xlu0 %43
    %v45 = vmul.f32 %v41, 0.00390625
    %v46 = vmul.f32 %v44, 0.00390625
    %v47 = vld [vmem:[%s1] sm:$0xff]
    %v48 = vld [vmem:[%s2] sm:$0x1]
    %v50 = vlaneseq
    %v51 = vshrl.u32 %v50, 7
    %v52 = vsub.s32 0, %v51
    %v53 = vrot.slane %v48, %v52
    %v57 = vlaneseq
    %v58 = vand.u32 %v57, 127
    %v59 = vlaneseq
    %v60 = vshrl.u32 %v59, 7
    %v61 = vsub.s32 %v58, %v60
    %v62 = vrot.slane %v45, %v61
    %v63 = vlaneseq
    %v64 = vshrl.u32 %v63, 7
    %v65 = vsub.s32 %v58, %v64
    %v66 = vrot.slane %v46, %v65
    %vm67 = vcmask 1041409
    %v68 = vsel %vm67, %v66, %v62
    %vm69 = vcmask 64512
    %v70 = vsel %vm69, %v68, 0
    %72 = vmatprep.subr.mxu0 0.0
    %73 = vmatpush1.msra.mxu0 %v47
    %74 = vmatprep.subr.mxu0 0.0
    %75 = vmatpush1.msra.mxu0 0.0
    %76 = vmatprep.subr.mxu0 0.0
    %77 = vmatpush1.msra.mxu0 0.0
    %78 = vmatprep.subr.mxu0 0.0
    %79 = vmatpush1.msra.mxu0 0.0
    %80 = vmatprep.subr.mxu0 0.0
    %81 = vmatpush1.msra.mxu0 0.0
    %82 = vmatprep.subr.mxu0 0.0
    %83 = vmatpush1.msra.mxu0 0.0
    %84 = vmatprep.subr.mxu0 0.0
    %85 = vmatpush1.msra.mxu0 0.0
    %86 = vmatprep.subr.mxu0 0.0
    %87 = vmatpush1.msra.mxu0 0.0
    %88 = vmatprep.subr.mxu0 0.0
    %89 = vmatpush1.msra.mxu0 0.0
    %90 = vmatprep.subr.mxu0 0.0
    %91 = vmatpush1.msra.mxu0 0.0
    %92 = vmatprep.subr.mxu0 0.0
    %93 = vmatpush1.msra.mxu0 0.0
    %94 = vmatprep.subr.mxu0 0.0
    %95 = vmatpush1.msra.mxu0 0.0
    %96 = vmatprep.subr.mxu0 0.0
    %97 = vmatpush1.msra.mxu0 0.0
    %98 = vmatprep.subr.mxu0 0.0
    %99 = vmatpush1.msra.mxu0 0.0
    %100 = vmatprep.subr.mxu0 0.0
    %101 = vmatpush1.msra.mxu0 0.0
    %102 = vmatprep.subr.mxu0 0.0
    %103 = vmatpush1.msra.mxu0 0.0
    %104 = vmatprep.subr.mxu0 0.0
    %105 = vmatpush1.msra.mxu0 0.0
    %106 = vmatprep.subr.mxu0 0.0
    %107 = vmatpush1.msra.mxu0 0.0
    %108 = vmatprep.subr.mxu0 0.0
    %109 = vmatpush1.msra.mxu0 0.0
    %110 = vmatprep.subr.mxu0 0.0
    %111 = vmatpush1.msra.mxu0 0.0
    %112 = vmatprep.subr.mxu0 0.0
    %113 = vmatpush1.msra.mxu0 0.0
    %114 = vmatprep.subr.mxu0 0.0
    %115 = vmatpush1.msra.mxu0 0.0
    %116 = vmatprep.subr.mxu0 0.0
    %117 = vmatpush1.msra.mxu0 0.0
    %118 = vmatprep.subr.mxu0 0.0
    %119 = vmatpush1.msra.mxu0 0.0
    %120 = vmatprep.subr.mxu0 0.0
    %121 = vmatpush1.msra.mxu0 0.0
    %122 = vmatprep.subr.mxu0 0.0
    %123 = vmatpush1.msra.mxu0 0.0
    %124 = vmatprep.subr.mxu0 0.0
    %125 = vmatpush1.msra.mxu0 0.0
    %126 = vmatprep.subr.mxu0 0.0
    %127 = vmatpush1.msra.mxu0 0.0
    %128 = vmatprep.subr.mxu0 0.0
    %129 = vmatpush1.msra.mxu0 0.0
    %130 = vmatprep.subr.mxu0 0.0
    %131 = vmatpush1.msra.mxu0 0.0
    %132 = vmatprep.subr.mxu0 0.0
    %133 = vmatpush1.msra.mxu0 0.0
    %134 = vmatprep.subr.mxu0 0.0
    %135 = vmatpush1.msra.mxu0 0.0
    %136 = vmatprep.mubr.f32.mxu0 0.0
    %137 = vmatmul.mubr.f32.gmra.mrb[0].mxu0 %v70
    %v138 = vpop.f32.mrb[0].mxu0
    %v139 = vadd.f32 %v53, %v138
    %v140 = vpop.f32.mrb[0].mxu0
    %141 = vdwg.mxu0
    %v142 = vmax.f32 %v139, 0.0
    %v143 = vld [vmem:[%s3] sm:$0x3]
    %v144 = vld [vmem:[%s4] sm:$0x1]
    %v146 = vlaneseq
    %v147 = vshrl.u32 %v146, 7
    %v148 = vsub.s32 0, %v147
    %v149 = vrot.slane %v144, %v148
    %vm151 = vcmask 15360
    %v153 = vsel %vm151, %v142, 0
    %vm155 = vcmask 1041408
    %v157 = vsel %vm155, %v143, 0
    %159 = vmatprep.subr.mxu0 0.0
    %160 = vmatpush1.msra.mxu0 %v157
    %161 = vmatprep.subr.mxu0 0.0
    %162 = vmatpush1.msra.mxu0 0.0
    %163 = vmatprep.subr.mxu0 0.0
    %164 = vmatpush1.msra.mxu0 0.0
    %165 = vmatprep.subr.mxu0 0.0
    %166 = vmatpush1.msra.mxu0 0.0
    %167 = vmatprep.subr.mxu0 0.0
    %168 = vmatpush1.msra.mxu0 0.0
    %169 = vmatprep.subr.mxu0 0.0
    %170 = vmatpush1.msra.mxu0 0.0
    %171 = vmatprep.subr.mxu0 0.0
    %172 = vmatpush1.msra.mxu0 0.0
    %173 = vmatprep.subr.mxu0 0.0
    %174 = vmatpush1.msra.mxu0 0.0
    %175 = vmatprep.subr.mxu0 0.0
    %176 = vmatpush1.msra.mxu0 0.0
    %177 = vmatprep.subr.mxu0 0.0
    %178 = vmatpush1.msra.mxu0 0.0
    %179 = vmatprep.subr.mxu0 0.0
    %180 = vmatpush1.msra.mxu0 0.0
    %181 = vmatprep.subr.mxu0 0.0
    %182 = vmatpush1.msra.mxu0 0.0
    %183 = vmatprep.subr.mxu0 0.0
    %184 = vmatpush1.msra.mxu0 0.0
    %185 = vmatprep.subr.mxu0 0.0
    %186 = vmatpush1.msra.mxu0 0.0
    %187 = vmatprep.subr.mxu0 0.0
    %188 = vmatpush1.msra.mxu0 0.0
    %189 = vmatprep.subr.mxu0 0.0
    %190 = vmatpush1.msra.mxu0 0.0
    %191 = vmatprep.subr.mxu0 0.0
    %192 = vmatpush1.msra.mxu0 0.0
    %193 = vmatprep.subr.mxu0 0.0
    %194 = vmatpush1.msra.mxu0 0.0
    %195 = vmatprep.subr.mxu0 0.0
    %196 = vmatpush1.msra.mxu0 0.0
    %197 = vmatprep.subr.mxu0 0.0
    %198 = vmatpush1.msra.mxu0 0.0
    %199 = vmatprep.subr.mxu0 0.0
    %200 = vmatpush1.msra.mxu0 0.0
    %201 = vmatprep.subr.mxu0 0.0
    %202 = vmatpush1.msra.mxu0 0.0
    %203 = vmatprep.subr.mxu0 0.0
    %204 = vmatpush1.msra.mxu0 0.0
    %205 = vmatprep.subr.mxu0 0.0
    %206 = vmatpush1.msra.mxu0 0.0
    %207 = vmatprep.subr.mxu0 0.0
    %208 = vmatpush1.msra.mxu0 0.0
    %209 = vmatprep.subr.mxu0 0.0
    %210 = vmatpush1.msra.mxu0 0.0
    %211 = vmatprep.subr.mxu0 0.0
    %212 = vmatpush1.msra.mxu0 0.0
    %213 = vmatprep.subr.mxu0 0.0
    %214 = vmatpush1.msra.mxu0 0.0
    %215 = vmatprep.subr.mxu0 0.0
    %216 = vmatpush1.msra.mxu0 0.0
    %217 = vmatprep.subr.mxu0 0.0
    %218 = vmatpush1.msra.mxu0 0.0
    %219 = vmatprep.subr.mxu0 0.0
    %220 = vmatpush1.msra.mxu0 0.0
    %221 = vmatprep.subr.mxu0 0.0
    %222 = vmatpush1.msra.mxu0 0.0
    %223 = vmatprep.mubr.f32.mxu0 0.0
    %224 = vmatmul.mubr.f32.gmra.mrb[0].mxu0 %v153
    %v225 = vpop.f32.mrb[0].mxu0
    %v226 = vadd.f32 %v149, %v225
    %v227 = vpop.f32.mrb[0].mxu0
    %228 = vdwg.mxu0
    %v229 = vxor.u32 %v226, 2147483648
    %v230 = vmul.f32 %v229, 1.442695
    %v231 = vpow.pop %v230
    %v232 = vadd.f32 %v231, 1.0
    %v233 = vrcp.pop %v232
    %v234 = vmul.f32 1.0, %v233
    %v235 = vlaneseq
    %v236 = vshrl.u32 %v235, 7
    %v237 = vsub.s32 0, %v236
    %v238 = vrot.slane %v234, %v237
    %240 = vbcast.lane.b32.xlu0 %v238, 256
    %v241 = vpop.permute.xlu0 %240
    %v242 = vlaneseq
    %v243 = vshrl.u32 %v242, 7
    %v244 = vsub.s32 1, %v243
    %v245 = vrot.slane %v234, %v244
    %247 = vbcast.lane.b32.xlu0 %v245, 256
    %v248 = vpop.permute.xlu0 %247
    %v249 = vmul.f32 %v35, %v241
    %v250 = vmul.f32 %v36, %v241
    %v251 = vmul.f32 %v37, %v248
    %v252 = vmul.f32 %v38, %v248
    %253 = vst [vmem:[#allocation5] sm:$0xff] %v249
    %254 = vst [vmem:[#allocation5 + $0x8] sm:$0xff] %v250
    %255 = vst [vmem:[#allocation5 + $0x10] sm:$0xff] %v251
    %256 = vst [vmem:[#allocation5 + $0x18] sm:$0xff] %v252
    // Predicated region
    $region26: #{tpu_custom_call.1} parent=1 // pred_check
      _
    $region27: #{tpu_custom_call.1} parent=1 // pred_check_branch
      %258 = sbr.rel (0) target = $region29
    $region28: #{tpu_custom_call.1} parent=1 // pred_region
      %s260 = ssub.s32 512, 512
      %261 = vsyncadd [#allocation4], %s260
      %s262 = sshll.u32 [#allocation5], 4
      %s263 = int_to_ptr.vmem [resolvable:$true] %s262
      %268 = dma.vmem_to_hbm [thread:$0]  %s263, 512, %s5, [#allocation4], 256, 256, 16
    $region29: #{tpu_custom_call.1} parent=1 // pred_fallthru
      _
    // Predicated region
    $region30: #{tpu_custom_call.1} parent=1 // pred_check
      _
    $region31: #{tpu_custom_call.1} parent=1 // pred_check_branch
      %270 = sbr.rel (0) target = $region33
    $region32: #{tpu_custom_call.1} parent=1 // pred_region
      %271 = dma.done [#allocation4], 512
    $region33: #{tpu_custom_call.1} parent=1 // pred_fallthru
      _
    %272 = vsyncpa [#allocation3], 1
    %273 = vsyncpa [#allocation4], 1

</llo_original>
